<compile_context>
chip_gen: v6e
topology: v6e:2x2x1
jax: 0.10.0
libtpu: 0.0.40
codegen_flags: <defaults>
</compile_context>

<pallas_src>
import math
import functools

import jax
import jax.numpy as jnp
from jax.experimental import pallas as pl
from jax.experimental.pallas import tpu as pltpu

HIDDEN = 250       # logical hidden width (matches the PyTorch module)
HIDDEN_PAD = 256   # lane-aligned padded hidden width used inside the kernel
OUT_PAD = 128      # lane-aligned padded output width (action_dim <= OUT_PAD)
MAX_TB = 128       # batch tile cap (keeps f32 activations at ~half the vregs)


def _round_up(x, m):
    return ((x + m - 1) // m) * m


def _sigmoid_via_tanh(x):
    # Numerically stable logistic: sigmoid(x) = 0.5 * (tanh(x/2) + 1).
    return 0.5 * (jnp.tanh(0.5 * x) + 1.0)


def _actor_kernel(s_ref, w1_ref, w2_ref, w3_ref, b_ref, out_ref,
                  *, action_limit_v, action_limit_w):
    x = s_ref[...]                       # [TB, state_dim] bf16 (cast in wrapper)
    b = b_ref[...]                       # [3, HIDDEN_PAD] f32 (packed biases)

    # fa1 + relu  (bf16 MXU operands, f32 accumulation, f32 elementwise)
    h1 = jnp.dot(x, w1_ref[...], preferred_element_type=jnp.float32)
    h1 = jnp.maximum(h1 + b[0:1, :], 0.0)

    # fa2 + relu
    h2 = jnp.dot(h1.astype(jnp.bfloat16), w2_ref[...],
                 preferred_element_type=jnp.float32)
    h2 = jnp.maximum(h2 + b[1:2, :], 0.0)

    # fa3 (raw action, padded to OUT_PAD lanes; padded cols are exactly 0)
    a = jnp.dot(h2.astype(jnp.bfloat16), w3_ref[...],
                preferred_element_type=jnp.float32)     # [TB, OUT_PAD]
    a = a + b[2:3, :OUT_PAD]

    # column 0: sigmoid * v_limit ; column 1: tanh * w_limit ; others untouched
    col = jax.lax.broadcasted_iota(jnp.int32, a.shape, dimension=1)
    sig = _sigmoid_via_tanh(a) * jnp.float32(action_limit_v)
    tnh = jnp.tanh(a) * jnp.float32(action_limit_w)
    out = jnp.where(col == 0, sig, jnp.where(col == 1, tnh, a))

    out_ref[...] = out.astype(out_ref.dtype)            # full 128-lane store


def init_actor_params(key, state_dim, action_dim):
    """Matches the PyTorch module: xavier_uniform_ weights, biases = 0.01.
    Weights are stored transposed ([in, out]) so the kernel does x @ W."""
    def xavier(k, fan_in, fan_out):
        bound = math.sqrt(6.0 / (fan_in + fan_out))
        return jax.random.uniform(k, (fan_in, fan_out), jnp.float32, -bound, bound)

    k1, k2, k3 = jax.random.split(key, 3)
    return {
        "w1": xavier(k1, state_dim, HIDDEN),
        "b1": jnp.full((HIDDEN,), 0.01, jnp.float32),
        "w2": xavier(k2, HIDDEN, HIDDEN),
        "b2": jnp.full((HIDDEN,), 0.01, jnp.float32),
        "w3": xavier(k3, HIDDEN, action_dim),
        "b3": jnp.full((action_dim,), 0.01, jnp.float32),
    }


def pack_actor_params(params):
    """Pad hidden 250->256 and output action_dim->128 (zeros, so math is
    unchanged), cast weights to bf16, pack biases into one lane-aligned f32
    array."""
    state_dim = params["w1"].shape[0]
    action_dim = params["w3"].shape[1]
    assert action_dim <= OUT_PAD, "action_dim must be <= OUT_PAD (128)"

    w1 = jnp.zeros((state_dim, HIDDEN_PAD), jnp.float32)
    w1 = w1.at[:, :HIDDEN].set(params["w1"]).astype(jnp.bfloat16)

    w2 = jnp.zeros((HIDDEN_PAD, HIDDEN_PAD), jnp.float32)
    w2 = w2.at[:HIDDEN, :HIDDEN].set(params["w2"]).astype(jnp.bfloat16)

    w3 = jnp.zeros((HIDDEN_PAD, OUT_PAD), jnp.float32)
    w3 = w3.at[:HIDDEN, :action_dim].set(params["w3"]).astype(jnp.bfloat16)

    b = jnp.zeros((3, HIDDEN_PAD), jnp.float32)
    b = b.at[0, :HIDDEN].set(params["b1"])
    b = b.at[1, :HIDDEN].set(params["b2"])
    b = b.at[2, :action_dim].set(params["b3"])

    return {"w1": w1, "w2": w2, "w3": w3, "b": b, "action_dim": action_dim}


def actor_forward(state, packed, action_limit_v, action_limit_w):
    """Actor forward pass. state: [B, state_dim] or [state_dim] float32."""
    squeeze = state.ndim == 1
    if squeeze:
        state = state[None, :]

    B, state_dim = state.shape
    action_dim = packed["action_dim"]

    # Stream state in bf16 (half the DMA bytes; same MXU operand precision).
    state = state.astype(jnp.bfloat16)

    # Batch tiling: pad to a sublane multiple; cap the tile at 128 rows so
    # f32 activations never exceed ~half the vreg file and v7x gets >= 2
    # parallel programs at B >= 256.
    B_pad = _round_up(B, 8)
    if B_pad <= MAX_TB:
        TB = B_pad
    else:
        TB = MAX_TB
        B_pad = _round_up(B_pad, TB)
    if B_pad != B:
        state = jnp.pad(state, ((0, B_pad - B), (0, 0)))
    grid = (B_pad // TB,)

    kernel = functools.partial(
        _actor_kernel,
        action_limit_v=float(action_limit_v),
        action_limit_w=float(action_limit_w),
    )

    flops = 2 * B_pad * (state_dim * HIDDEN_PAD
                         + HIDDEN_PAD * HIDDEN_PAD
                         + HIDDEN_PAD * OUT_PAD)
    bytes_accessed = (state.size * 2
                      + packed["w1"].size * 2 + packed["w2"].size * 2
                      + packed["w3"].size * 2 + packed["b"].size * 4
                      + B_pad * OUT_PAD * 4)

    out = pl.pallas_call(
        kernel,
        grid=grid,
        in_specs=[
            pl.BlockSpec((TB, state_dim), lambda i: (i, 0)),        # state tile
            pl.BlockSpec(packed["w1"].shape, lambda i: (0, 0)),     # resident
            pl.BlockSpec(packed["w2"].shape, lambda i: (0, 0)),     # resident
            pl.BlockSpec(packed["w3"].shape, lambda i: (0, 0)),     # resident
            pl.BlockSpec(packed["b"].shape, lambda i: (0, 0)),      # resident
        ],
        out_specs=pl.BlockSpec((TB, OUT_PAD), lambda i: (i, 0)),
        out_shape=jax.ShapeDtypeStruct((B_pad, OUT_PAD), jnp.float32),
        compiler_params=pltpu.CompilerParams(
            dimension_semantics=("parallel",)),
        cost_estimate=pl.CostEstimate(
            flops=flops,
            transcendentals=2 * B_pad * OUT_PAD,
            bytes_accessed=bytes_accessed),
    )(state, packed["w1"], packed["w2"], packed["w3"], packed["b"])

    out = out[:B, :action_dim]
    if squeeze:
        out = out[0]
    return out


def _reference_forward_bf16(state, params, action_limit_v, action_limit_w):
    """Pure-JAX reference that mimics the kernel's bf16 matmul operands."""
    def q(x):
        return x.astype(jnp.bfloat16).astype(jnp.float32)
    h = jnp.maximum(jnp.dot(q(state), q(params["w1"])) + params["b1"], 0.0)
    h = jnp.maximum(jnp.dot(q(h), q(params["w2"])) + params["b2"], 0.0)
    a = jnp.dot(q(h), q(params["w3"])) + params["b3"]
    a0 = _sigmoid_via_tanh(a[:, 0]) * action_limit_v
    a1 = jnp.tanh(a[:, 1]) * action_limit_w
    return a.at[:, 0].set(a0).at[:, 1].set(a1)


def _reference_forward_f32(state, params, action_limit_v, action_limit_w):
    """Full-precision reference (semantic sanity check only)."""
    h = jnp.maximum(state @ params["w1"] + params["b1"], 0.0)
    h = jnp.maximum(h @ params["w2"] + params["b2"], 0.0)
    a = h @ params["w3"] + params["b3"]
    a0 = jax.nn.sigmoid(a[:, 0]) * action_limit_v
    a1 = jnp.tanh(a[:, 1]) * action_limit_w
    return a.at[:, 0].set(a0).at[:, 1].set(a1)


if __name__ == "__main__":
    key = jax.random.PRNGKey(0)
    pkey, skey = jax.random.split(key)

    state_dim = 16
    action_dim = 2
    batch = 8
    action_limit_v = 0.22
    action_limit_w = 2.0

    params = init_actor_params(pkey, state_dim, action_dim)
    packed = pack_actor_params(params)
    state = jax.random.normal(skey, (batch, state_dim), jnp.float32)

    action = jax.block_until_ready(
        actor_forward(state, packed, action_limit_v, action_limit_w))
    assert action.shape == (batch, action_dim)

    # Tight check against a reference that uses the same bf16 operand precision.
    ref_bf16 = _reference_forward_bf16(state, params, action_limit_v, action_limit_w)
    assert jnp.allclose(action, ref_bf16, atol=1e-4, rtol=1e-4), "mismatch vs bf16 reference"

    # Loose semantic check against the full-f32 PyTorch-equivalent math.
    ref_f32 = _reference_forward_f32(state, params, action_limit_v, action_limit_w)
    assert jnp.allclose(action, ref_f32, atol=1e-1), "mismatch vs f32 reference"

    # Exercise the unbatched (1-D state) branch (batch padded to 8 internally).
    a1d = jax.block_until_ready(
        actor_forward(state[0], packed, action_limit_v, action_limit_w))
    assert a1d.shape == (action_dim,)
    assert jnp.allclose(a1d, ref_bf16[0], atol=1e-4, rtol=1e-4)

    # Exercise the tiled / multi-program path (B > 128 -> grid of 2+ programs).
    big_state = jax.random.normal(jax.random.PRNGKey(1), (300, state_dim), jnp.float32)
    big_action = jax.block_until_ready(
        actor_forward(big_state, packed, action_limit_v, action_limit_w))
    assert big_action.shape == (300, action_dim)
    big_ref = _reference_forward_bf16(big_state, params, action_limit_v, action_limit_w)
    assert jnp.allclose(big_action, big_ref, atol=1e-4, rtol=1e-4), "mismatch at large batch"

    print("KERNEL_OK")
</pallas_src>

<mosaic_0001>
module attributes {stable_mosaic.version = 11 : i64} {
  func.func @_actor_kernel(%arg0: i32, %arg1: memref<8x16xbf16, #tpu.memory_space<vmem>>, %arg2: memref<16x256xbf16, #tpu.memory_space<vmem>>, %arg3: memref<256x256xbf16, #tpu.memory_space<vmem>>, %arg4: memref<256x128xbf16, #tpu.memory_space<vmem>>, %arg5: memref<3x256xf32, #tpu.memory_space<vmem>>, %arg6: memref<8x128xf32, #tpu.memory_space<vmem>>) attributes {dimension_semantics = [#tpu.dimension_semantics<parallel>], iteration_bounds = array<i64: 1>, scalar_prefetch = 0 : i64, scratch_operands = 0 : i64, tpu.core_type = #tpu.core_type<tc>, window_params = [{transform_indices = @transform_0, window_bounds = array<i64: 8, 16>}, {pipeline_mode = #tpu.pipeline_mode<synchronous>, transform_indices = @transform_1, window_bounds = array<i64: 16, 256>}, {pipeline_mode = #tpu.pipeline_mode<synchronous>, transform_indices = @transform_2, window_bounds = array<i64: 256, 256>}, {pipeline_mode = #tpu.pipeline_mode<synchronous>, transform_indices = @transform_3, window_bounds = array<i64: 256, 128>}, {pipeline_mode = #tpu.pipeline_mode<synchronous>, transform_indices = @transform_4, window_bounds = array<i64: 3, 256>}, {transform_indices = @transform_5, window_bounds = array<i64: 8, 128>}]} {
    %c0 = arith.constant 0 : index
    %c0_0 = arith.constant 0 : index
    %0 = vector.load %arg1[%c0, %c0_0] : memref<8x16xbf16, #tpu.memory_space<vmem>>, vector<8x16xbf16>
    %c0_1 = arith.constant 0 : index
    %c0_2 = arith.constant 0 : index
    %1 = vector.load %arg5[%c0_1, %c0_2] : memref<3x256xf32, #tpu.memory_space<vmem>>, vector<3x256xf32>
    %c0_3 = arith.constant 0 : index
    %c0_4 = arith.constant 0 : index
    %2 = vector.load %arg2[%c0_3, %c0_4] : memref<16x256xbf16, #tpu.memory_space<vmem>>, vector<16x256xbf16>
    %cst = arith.constant dense<0.000000e+00> : vector<8x256xf32>
    %3 = tpu.matmul %0, %2, %cst {dimension_numbers = #tpu.dot_dimension_numbers<[1], [0], [0], [1], [0, 0, 1, 1], [], []>} : vector<8x16xbf16>, vector<16x256xbf16>, vector<8x256xf32> -> vector<8x256xf32>
    %4 = vector.extract_strided_slice %1 {offsets = [0, 0], sizes = [1, 256], strides = [1, 1]} : vector<3x256xf32> to vector<1x256xf32>
    %5 = vector.broadcast %4 : vector<1x256xf32> to vector<8x256xf32>
    %6 = arith.addf %3, %5 : vector<8x256xf32>
    %cst_5 = arith.constant 0.000000e+00 : f32
    %7 = vector.broadcast %cst_5 : f32 to vector<8x256xf32>
    %8 = arith.maximumf %6, %7 : vector<8x256xf32>
    %9 = arith.truncf %8 : vector<8x256xf32> to vector<8x256xbf16>
    %c0_6 = arith.constant 0 : index
    %c0_7 = arith.constant 0 : index
    %10 = vector.load %arg3[%c0_6, %c0_7] : memref<256x256xbf16, #tpu.memory_space<vmem>>, vector<256x256xbf16>
    %cst_8 = arith.constant dense<0.000000e+00> : vector<8x256xf32>
    %11 = tpu.matmul %9, %10, %cst_8 {dimension_numbers = #tpu.dot_dimension_numbers<[1], [0], [0], [1], [0, 0, 1, 1], [], []>} : vector<8x256xbf16>, vector<256x256xbf16>, vector<8x256xf32> -> vector<8x256xf32>
    %12 = vector.extract_strided_slice %1 {offsets = [1, 0], sizes = [1, 256], strides = [1, 1]} : vector<3x256xf32> to vector<1x256xf32>
    %13 = vector.broadcast %12 : vector<1x256xf32> to vector<8x256xf32>
    %14 = arith.addf %11, %13 : vector<8x256xf32>
    %cst_9 = arith.constant 0.000000e+00 : f32
    %15 = vector.broadcast %cst_9 : f32 to vector<8x256xf32>
    %16 = arith.maximumf %14, %15 : vector<8x256xf32>
    %17 = arith.truncf %16 : vector<8x256xf32> to vector<8x256xbf16>
    %c0_10 = arith.constant 0 : index
    %c0_11 = arith.constant 0 : index
    %18 = vector.load %arg4[%c0_10, %c0_11] : memref<256x128xbf16, #tpu.memory_space<vmem>>, vector<256x128xbf16>
    %cst_12 = arith.constant dense<0.000000e+00> : vector<8x128xf32>
    %19 = tpu.matmul %17, %18, %cst_12 {dimension_numbers = #tpu.dot_dimension_numbers<[1], [0], [0], [1], [0, 0, 1, 1], [], []>} : vector<8x256xbf16>, vector<256x128xbf16>, vector<8x128xf32> -> vector<8x128xf32>
    %20 = vector.extract_strided_slice %1 {offsets = [2, 0], sizes = [1, 128], strides = [1, 1]} : vector<3x256xf32> to vector<1x128xf32>
    %21 = vector.broadcast %20 : vector<1x128xf32> to vector<8x128xf32>
    %22 = arith.addf %19, %21 : vector<8x128xf32>
    %23 = tpu.iota {dimensions = array<i32: 1>} : vector<8x128xi32>
    %cst_13 = arith.constant 5.000000e-01 : f32
    %24 = vector.broadcast %cst_13 : f32 to vector<8x128xf32>
    %25 = arith.mulf %24, %22 : vector<8x128xf32>
    %26 = math.tanh %25 : vector<8x128xf32>
    %cst_14 = arith.constant 1.000000e+00 : f32
    %27 = vector.broadcast %cst_14 : f32 to vector<8x128xf32>
    %28 = arith.addf %26, %27 : vector<8x128xf32>
    %cst_15 = arith.constant 5.000000e-01 : f32
    %29 = vector.broadcast %cst_15 : f32 to vector<8x128xf32>
    %30 = arith.mulf %29, %28 : vector<8x128xf32>
    %cst_16 = arith.constant 2.200000e-01 : f32
    %31 = vector.broadcast %cst_16 : f32 to vector<8x128xf32>
    %32 = arith.mulf %30, %31 : vector<8x128xf32>
    %33 = math.tanh %22 : vector<8x128xf32>
    %cst_17 = arith.constant 2.000000e+00 : f32
    %34 = vector.broadcast %cst_17 : f32 to vector<8x128xf32>
    %35 = arith.mulf %33, %34 : vector<8x128xf32>
    %c0_i32 = arith.constant 0 : i32
    %36 = vector.broadcast %c0_i32 : i32 to vector<8x128xi32>
    %37 = arith.cmpi eq, %23, %36 : vector<8x128xi32>
    %c1_i32 = arith.constant 1 : i32
    %38 = vector.broadcast %c1_i32 : i32 to vector<8x128xi32>
    %39 = arith.cmpi eq, %23, %38 : vector<8x128xi32>
    %40 = arith.select %39, %35, %22 : vector<8x128xi1>, vector<8x128xf32>
    %41 = arith.select %37, %32, %40 : vector<8x128xi1>, vector<8x128xf32>
    %c0_18 = arith.constant 0 : index
    %c0_19 = arith.constant 0 : index
    %42 = vector.load %arg6[%c0_18, %c0_19] : memref<8x128xf32, #tpu.memory_space<vmem>>, vector<8x128xf32>
    tpu.vector_store %arg6[%c0_18, %c0_19], %41 {strides = array<i32>} : memref<8x128xf32, #tpu.memory_space<vmem>>, vector<8x128xf32>,
    return
  }
  func.func @transform_0(%arg0: i32) -> (i32, i32) {
    %c0_i32 = arith.constant 0 : i32
    %c0_i32_0 = arith.constant 0 : i32
    return %arg0, %c0_i32 : i32, i32
  }
  func.func @transform_1(%arg0: i32) -> (i32, i32) {
    %c0_i32 = arith.constant 0 : i32
    %c0_i32_0 = arith.constant 0 : i32
    %c0_i32_1 = arith.constant 0 : i32
    return %c0_i32, %c0_i32_0 : i32, i32
  }
  func.func @transform_2(%arg0: i32) -> (i32, i32) {
    %c0_i32 = arith.constant 0 : i32
    %c0_i32_0 = arith.constant 0 : i32
    %c0_i32_1 = arith.constant 0 : i32
    return %c0_i32, %c0_i32_0 : i32, i32
  }
  func.func @transform_3(%arg0: i32) -> (i32, i32) {
    %c0_i32 = arith.constant 0 : i32
    %c0_i32_0 = arith.constant 0 : i32
    %c0_i32_1 = arith.constant 0 : i32
    return %c0_i32, %c0_i32_0 : i32, i32
  }
  func.func @transform_4(%arg0: i32) -> (i32, i32) {
    %c0_i32 = arith.constant 0 : i32
    %c0_i32_0 = arith.constant 0 : i32
    %c0_i32_1 = arith.constant 0 : i32
    return %c0_i32, %c0_i32_0 : i32, i32
  }
  func.func @transform_5(%arg0: i32) -> (i32, i32) {
    %c0_i32 = arith.constant 0 : i32
    %c0_i32_0 = arith.constant 0 : i32
    return %arg0, %c0_i32 : i32, i32
  }
}

</mosaic_0001>

<llo_original>
// kernel: tpu_custom_call.1
$region0: #{tpu_custom_call.1}
  #allocation0 [shape = 'u32[]', space=smem, size = 0x4, offset = 0x4, fixed_abs, tag = 'smem constant byte address 0x4 - core index']
  #allocation1 [shape = 'u32[144,128]{1,0:T(1,128)}', space=vmem, size = 0x12000, scoped, tag = 'internal scratch']
  %s0 = inlined_call_operand.hbm [shape: bf16[8,16], index: 0, kind: input, shape index: {}]
  %s1 = inlined_call_operand.hbm [shape: bf16[16,256], index: 1, kind: input, shape index: {}]
  %s2 = inlined_call_operand.hbm [shape: bf16[256,256], index: 2, kind: input, shape index: {}]
  %s3 = inlined_call_operand.hbm [shape: bf16[256,128], index: 3, kind: input, shape index: {}]
  %s4 = inlined_call_operand.hbm [shape: f32[3,256], index: 4, kind: input, shape index: {}]
  %s5 = inlined_call_operand.hbm [shape: f32[8,128], index: 5, kind: output, shape index: {}]
  %s6 = sld [smem:[#allocation0]]
  $region50: #{tpu_custom_call.1} parent=0
    _
  %s8 = ssub.s32 1, %s6
  %s9 = scalar_select 0, %s8, %s6
  $region1: #{tpu_custom_call.1} parent=0
    #allocation2 [shape = 'u8[2048]{0}', space=vmem, size = 0x800, scoped, tag = 'input window, operand 0, single buffered']
    #allocation3 [shape = 's32[1]{0}', space=sflag, size = 0x4, scoped, tag = 'scoped memory for tpu_custom_call.1']
    #allocation4 [shape = 's32[1]{0}', space=sflag, size = 0x4, scoped, tag = 'scoped memory for tpu_custom_call.1']
    #allocation5 [shape = 'u8[8192]{0}', space=vmem, size = 0x2000, scoped, tag = 'input window, operand 1, single buffered']
    #allocation6 [shape = 's32[1]{0}', space=sflag, size = 0x4, scoped, tag = 'scoped memory for tpu_custom_call.1']
    #allocation7 [shape = 'u8[131072]{0}', space=vmem, size = 0x20000, scoped, tag = 'input window, operand 2, single buffered']
    #allocation8 [shape = 'u8[65536]{0}', space=vmem, size = 0x10000, scoped, tag = 'input window, operand 3, single buffered']
    #allocation9 [shape = 's32[1]{0}', space=sflag, size = 0x4, scoped, tag = 'scoped memory for tpu_custom_call.1']
    #allocation10 [shape = 'u8[4096]{0}', space=vmem, size = 0x1000, scoped, tag = 'input window, operand 4, single buffered']
    #allocation11 [shape = 'u8[4096]{0}', space=vmem, size = 0x1000, scoped, tag = 'output window, operand 0, single buffered']
    %10 = vsyncpa [#allocation3], 0
    %11 = vsyncpa [#allocation6], 0
    %12 = vsyncpa [#allocation9], 0
    %13 = vsyncpa [#allocation4], 0
    // Predicated region
    $region2: #{tpu_custom_call.1} parent=1 // pred_check
      _
    $region3: #{tpu_custom_call.1} parent=1 // pred_check_branch
      %15 = sbr.rel (0) target = $region5
    $region4: #{tpu_custom_call.1} parent=1 // pred_region
      %s17 = ssub.s32 64, 64
      %18 = vsyncadd [#allocation3], %s17
      %s20 = sshll.u32 [#allocation2], 4
      %s21 = int_to_ptr.vmem [resolvable:$true] %s20
      %23 = dma.hbm_to_vmem [thread:$0]  %s0, 64, %s21, [#allocation3]
    $region5: #{tpu_custom_call.1} parent=1 // pred_fallthru
      _
    // Predicated region
    $region6: #{tpu_custom_call.1} parent=1 // pred_check
      _
    $region7: #{tpu_custom_call.1} parent=1 // pred_check_branch
      %25 = sbr.rel (0) target = $region9
    $region8: #{tpu_custom_call.1} parent=1 // pred_region
      %s27 = ssub.s32 256, 256
      %28 = vsyncadd [#allocation6], %s27
      %s29 = sshll.u32 [#allocation5], 4
      %s30 = int_to_ptr.vmem [resolvable:$true] %s29
      %35 = dma.hbm_to_vmem [thread:$0]  %s1, 256, %s30, [#allocation6], 128, 128, 8
    $region9: #{tpu_custom_call.1} parent=1 // pred_fallthru
      _
    // Predicated region
    $region10: #{tpu_custom_call.1} parent=1 // pred_check
      _
    $region11: #{tpu_custom_call.1} parent=1 // pred_check_branch
      %37 = sbr.rel (0) target = $region13
    $region12: #{tpu_custom_call.1} parent=1 // pred_region
      %s39 = ssub.s32 4096, 4096
      %40 = vsyncadd [#allocation6], %s39
      %s41 = sshll.u32 [#allocation7], 4
      %s42 = int_to_ptr.vmem [resolvable:$true] %s41
      %47 = dma.hbm_to_vmem [thread:$0]  %s2, 4096, %s42, [#allocation6], 128, 128, 8
    $region13: #{tpu_custom_call.1} parent=1 // pred_fallthru
      _
    // Predicated region
    $region14: #{tpu_custom_call.1} parent=1 // pred_check
      _
    $region15: #{tpu_custom_call.1} parent=1 // pred_check_branch
      %49 = sbr.rel (0) target = $region17
    $region16: #{tpu_custom_call.1} parent=1 // pred_region
      %s51 = ssub.s32 2048, 2048
      %52 = vsyncadd [#allocation9], %s51
      %s53 = sshll.u32 [#allocation8], 4
      %s54 = int_to_ptr.vmem [resolvable:$true] %s53
      %59 = dma.hbm_to_vmem [thread:$0]  %s3, 2048, %s54, [#allocation9], 64, 64, 4
    $region17: #{tpu_custom_call.1} parent=1 // pred_fallthru
      _
    // Predicated region
    $region18: #{tpu_custom_call.1} parent=1 // pred_check
      _
    $region19: #{tpu_custom_call.1} parent=1 // pred_check_branch
      %61 = sbr.rel (0) target = $region21
    $region20: #{tpu_custom_call.1} parent=1 // pred_region
      %s63 = ssub.s32 128, 128
      %64 = vsyncadd [#allocation9], %s63
      %s66 = sshll.u32 [#allocation10], 4
      %s67 = int_to_ptr.vmem [resolvable:$true] %s66
      %69 = dma.hbm_to_vmem [thread:$0]  %s4, 128, %s67, [#allocation9]
    $region21: #{tpu_custom_call.1} parent=1 // pred_fallthru
      _
    // Predicated region
    $region22: #{tpu_custom_call.1} parent=1 // pred_check
      _
    $region23: #{tpu_custom_call.1} parent=1 // pred_check_branch
      %71 = sbr.rel (0) target = $region25
    $region24: #{tpu_custom_call.1} parent=1 // pred_region
      %72 = dma.done [#allocation3], 64
    $region25: #{tpu_custom_call.1} parent=1 // pred_fallthru
      _
    // Predicated region
    $region26: #{tpu_custom_call.1} parent=1 // pred_check
      _
    $region27: #{tpu_custom_call.1} parent=1 // pred_check_branch
      %74 = sbr.rel (0) target = $region29
    $region28: #{tpu_custom_call.1} parent=1 // pred_region
      %75 = dma.done [#allocation6], 256
    $region29: #{tpu_custom_call.1} parent=1 // pred_fallthru
      _
    // Predicated region
    $region30: #{tpu_custom_call.1} parent=1 // pred_check
      _
    $region31: #{tpu_custom_call.1} parent=1 // pred_check_branch
      %77 = sbr.rel (0) target = $region33
    $region32: #{tpu_custom_call.1} parent=1 // pred_region
      %78 = dma.done [#allocation6], 4096
    $region33: #{tpu_custom_call.1} parent=1 // pred_fallthru
      _
    // Predicated region
    $region34: #{tpu_custom_call.1} parent=1 // pred_check
      _
    $region35: #{tpu_custom_call.1} parent=1 // pred_check_branch
      %80 = sbr.rel (0) target = $region37
    $region36: #{tpu_custom_call.1} parent=1 // pred_region
      %81 = dma.done [#allocation9], 2048
    $region37: #{tpu_custom_call.1} parent=1 // pred_fallthru
      _
    // Predicated region
    $region38: #{tpu_custom_call.1} parent=1 // pred_check
      _
    $region39: #{tpu_custom_call.1} parent=1 // pred_check_branch
      %83 = sbr.rel (0) target = $region41
    $region40: #{tpu_custom_call.1} parent=1 // pred_region
      %84 = dma.done [#allocation9], 128
    $region41: #{tpu_custom_call.1} parent=1 // pred_fallthru
      _
    %v86 = vld [vmem:[#allocation2] sm:$0xf]
    %v87 = vld [vmem:[#allocation10] sm:$0x77]
    %v88 = vld [vmem:[#allocation5] sm:$0xff]
    %v89 = vld [vmem:[#allocation5 + $0x8] sm:$0xff]
    %v91 = vlaneseq
    %v92 = vshrl.u32 %v91, 7
    %v93 = vsub.s32 0, %v92
    %v94 = vrot.slane %v87, %v93
    %v95 = vlaneseq
    %v96 = vshrl.u32 %v95, 7
    %v97 = vsub.s32 4, %v96
    %v98 = vrot.slane %v87, %v97
    %v101 = vlaneseq
    %v102 = vshrl.u32 %v101, 7
    %v103 = vsub.s32 0, %v102
    %v104 = vrot.slane %v94, %v103
    %v105 = vlaneseq
    %v106 = vshrl.u32 %v105, 7
    %v107 = vsub.s32 0, %v106
    %v108 = vrot.slane %v98, %v107
    %v111 = vunpack.c.l.b16 %v88
    %v112 = vunpack.c.h.b16 %v88
    %v113 = vunpack.c.l.b16 %v89
    %v114 = vunpack.c.h.b16 %v89
    %v115 = vpack.c.b16 %v113, %v111
    %v116 = vpack.c.b16 %v114, %v112
    %vm119 = vcmask 130048
    %v121 = vsel %vm119, %v86, 0
    %123 = vmatprep.subr.bf16.mxu0 0
    %124 = vmatpush1.bf16.msra.mxu0 0
    %125 = vmatprep.subr.bf16.mxu0 0
    %126 = vmatpush1.bf16.msra.mxu0 0
    %127 = vmatprep.subr.bf16.mxu0 0
    %128 = vmatpush1.bf16.msra.mxu0 0
    %129 = vmatprep.subr.bf16.mxu0 0
    %130 = vmatpush1.bf16.msra.mxu0 0
    %131 = vmatprep.subr.bf16.mxu0 0
    %132 = vmatpush1.bf16.msra.mxu0 0
    %133 = vmatprep.subr.bf16.mxu0 0
    %134 = vmatpush1.bf16.msra.mxu0 0
    %135 = vmatprep.subr.bf16.mxu0 0
    %136 = vmatpush1.bf16.msra.mxu0 0
    %137 = vmatprep.subr.bf16.mxu0 %v116
    %138 = vmatpush1.bf16.msra.mxu0 %v115
    %139 = vmatprep.subr.bf16.mxu0 0
    %140 = vmatpush2.bf16.msra.mxu0 0
    %141 = vmatprep.subr.bf16.mxu0 0
    %142 = vmatpush2.bf16.msra.mxu0 0
    %143 = vmatprep.subr.bf16.mxu0 0
    %144 = vmatpush2.bf16.msra.mxu0 0
    %145 = vmatprep.subr.bf16.mxu0 0
    %146 = vmatpush2.bf16.msra.mxu0 0
    %147 = vmatprep.subr.bf16.mxu0 0
    %148 = vmatpush2.bf16.msra.mxu0 0
    %149 = vmatprep.subr.bf16.mxu0 0
    %150 = vmatpush2.bf16.msra.mxu0 0
    %151 = vmatprep.subr.bf16.mxu0 0
    %152 = vmatpush2.bf16.msra.mxu0 0
    %153 = vmatprep.subr.bf16.mxu0 0
    %154 = vmatpush2.bf16.msra.mxu0 0
    %155 = vmatprep.mubr.bf16.mxu0 0
    %156 = vmatmul.mubr.bf16.gmra.mxu0 %v121
    %v157 = vpop.f32.mrf.mxu0
    %v158 = vadd.f32 %v104, %v157
    %v159 = vpop.f32.mrf.mxu0
    %v160 = vadd.f32 %v108, %v159
    %v161 = vpop.f32.mrf.mxu0
    %v162 = vpop.f32.mrf.mxu0
    %163 = vdwg.mxu0
    %v164 = vmax.f32 %v158, 0.0
    %v165 = vmax.f32 %v160, 0.0
    %v166 = vpack.c.bf16 %v164, %v164
    %v167 = vpack.c.bf16 %v165, %v165
    %v168 = vld [vmem:[#allocation7] sm:$0xff]
    %v169 = vld [vmem:[#allocation7 + $0x8] sm:$0xff]
    %v170 = vld [vmem:[#allocation7 + $0x10] sm:$0xff]
    %v171 = vld [vmem:[#allocation7 + $0x18] sm:$0xff]
    %v172 = vld [vmem:[#allocation7 + $0x20] sm:$0xff]
    %v173 = vld [vmem:[#allocation7 + $0x28] sm:$0xff]
    %v174 = vld [vmem:[#allocation7 + $0x30] sm:$0xff]
    %v175 = vld [vmem:[#allocation7 + $0x38] sm:$0xff]
    %v176 = vld [vmem:[#allocation7 + $0x40] sm:$0xff]
    %v177 = vld [vmem:[#allocation7 + $0x48] sm:$0xff]
    %v178 = vld [vmem:[#allocation7 + $0x50] sm:$0xff]
    %v179 = vld [vmem:[#allocation7 + $0x58] sm:$0xff]
    %v180 = vld [vmem:[#allocation7 + $0x60] sm:$0xff]
    %v181 = vld [vmem:[#allocation7 + $0x68] sm:$0xff]
    %v182 = vld [vmem:[#allocation7 + $0x70] sm:$0xff]
    %v183 = vld [vmem:[#allocation7 + $0x78] sm:$0xff]
    %v184 = vld [vmem:[#allocation7 + $0x80] sm:$0xff]
    %v185 = vld [vmem:[#allocation7 + $0x88] sm:$0xff]
    %v186 = vld [vmem:[#allocation7 + $0x90] sm:$0xff]
    %v187 = vld [vmem:[#allocation7 + $0x98] sm:$0xff]
    %v188 = vld [vmem:[#allocation7 + $0xa0] sm:$0xff]
    %v189 = vld [vmem:[#allocation7 + $0xa8] sm:$0xff]
    %v190 = vld [vmem:[#allocation7 + $0xb0] sm:$0xff]
    %v191 = vld [vmem:[#allocation7 + $0xb8] sm:$0xff]
    %v192 = vld [vmem:[#allocation7 + $0xc0] sm:$0xff]
    %v193 = vld [vmem:[#allocation7 + $0xc8] sm:$0xff]
    %v194 = vld [vmem:[#allocation7 + $0xd0] sm:$0xff]
    %v195 = vld [vmem:[#allocation7 + $0xd8] sm:$0xff]
    %v196 = vld [vmem:[#allocation7 + $0xe0] sm:$0xff]
    %v197 = vld [vmem:[#allocation7 + $0xe8] sm:$0xff]
    %v198 = vld [vmem:[#allocation7 + $0xf0] sm:$0xff]
    %v199 = vld [vmem:[#allocation7 + $0xf8] sm:$0xff]
    %v200 = vlaneseq
    %v201 = vshrl.u32 %v200, 7
    %v202 = vsub.s32 1, %v201
    %v203 = vrot.slane %v87, %v202
    %v204 = vlaneseq
    %v205 = vshrl.u32 %v204, 7
    %v206 = vsub.s32 5, %v205
    %v207 = vrot.slane %v87, %v206
    %v210 = vlaneseq
    %v211 = vshrl.u32 %v210, 7
    %v212 = vsub.s32 1, %v211
    %v213 = vrot.slane %v203, %v212
    %v214 = vlaneseq
    %v215 = vshrl.u32 %v214, 7
    %v216 = vsub.s32 1, %v215
    %v217 = vrot.slane %v207, %v216
    %v250 = vunpack.c.l.b16 %v168
    %v251 = vunpack.c.h.b16 %v168
    %v252 = vunpack.c.l.b16 %v169
    %v253 = vunpack.c.h.b16 %v169
    %v254 = vunpack.c.l.b16 %v170
    %v255 = vunpack.c.h.b16 %v170
    %v256 = vunpack.c.l.b16 %v171
    %v257 = vunpack.c.h.b16 %v171
    %v258 = vunpack.c.l.b16 %v172
    %v259 = vunpack.c.h.b16 %v172
    %v260 = vunpack.c.l.b16 %v173
    %v261 = vunpack.c.h.b16 %v173
    %v262 = vunpack.c.l.b16 %v174
    %v263 = vunpack.c.h.b16 %v174
    %v264 = vunpack.c.l.b16 %v175
    %v265 = vunpack.c.h.b16 %v175
    %v266 = vunpack.c.l.b16 %v176
    %v267 = vunpack.c.h.b16 %v176
    %v268 = vunpack.c.l.b16 %v177
    %v269 = vunpack.c.h.b16 %v177
    %v270 = vunpack.c.l.b16 %v178
    %v271 = vunpack.c.h.b16 %v178
    %v272 = vunpack.c.l.b16 %v179
    %v273 = vunpack.c.h.b16 %v179
    %v274 = vunpack.c.l.b16 %v180
    %v275 = vunpack.c.h.b16 %v180
    %v276 = vunpack.c.l.b16 %v181
    %v277 = vunpack.c.h.b16 %v181
    %v278 = vunpack.c.l.b16 %v182
    %v279 = vunpack.c.h.b16 %v182
    %v280 = vunpack.c.l.b16 %v183
    %v281 = vunpack.c.h.b16 %v183
    %v282 = vunpack.c.l.b16 %v184
    %v283 = vunpack.c.h.b16 %v184
    %v284 = vunpack.c.l.b16 %v185
    %v285 = vunpack.c.h.b16 %v185
    %v286 = vunpack.c.l.b16 %v186
    %v287 = vunpack.c.h.b16 %v186
    %v288 = vunpack.c.l.b16 %v187
    %v289 = vunpack.c.h.b16 %v187
    %v290 = vunpack.c.l.b16 %v188
    %v291 = vunpack.c.h.b16 %v188
    %v292 = vunpack.c.l.b16 %v189
    %v293 = vunpack.c.h.b16 %v189
    %v294 = vunpack.c.l.b16 %v190
    %v295 = vunpack.c.h.b16 %v190
    %v296 = vunpack.c.l.b16 %v191
    %v297 = vunpack.c.h.b16 %v191
    %v298 = vunpack.c.l.b16 %v192
    %v299 = vunpack.c.h.b16 %v192
    %v300 = vunpack.c.l.b16 %v193
    %v301 = vunpack.c.h.b16 %v193
    %v302 = vunpack.c.l.b16 %v194
    %v303 = vunpack.c.h.b16 %v194
    %v304 = vunpack.c.l.b16 %v195
    %v305 = vunpack.c.h.b16 %v195
    %v306 = vunpack.c.l.b16 %v196
    %v307 = vunpack.c.h.b16 %v196
    %v308 = vunpack.c.l.b16 %v197
    %v309 = vunpack.c.h.b16 %v197
    %v310 = vunpack.c.l.b16 %v198
    %v311 = vunpack.c.h.b16 %v198
    %v312 = vunpack.c.l.b16 %v199
    %v313 = vunpack.c.h.b16 %v199
    %v314 = vpack.c.b16 %v252, %v250
    %v315 = vpack.c.b16 %v253, %v251
    %v316 = vpack.c.b16 %v256, %v254
    %v317 = vpack.c.b16 %v257, %v255
    %v318 = vpack.c.b16 %v260, %v258
    %v319 = vpack.c.b16 %v261, %v259
    %v320 = vpack.c.b16 %v264, %v262
    %v321 = vpack.c.b16 %v265, %v263
    %v322 = vpack.c.b16 %v268, %v266
    %v323 = vpack.c.b16 %v269, %v267
    %v324 = vpack.c.b16 %v272, %v270
    %v325 = vpack.c.b16 %v273, %v271
    %v326 = vpack.c.b16 %v276, %v274
    %v327 = vpack.c.b16 %v277, %v275
    %v328 = vpack.c.b16 %v280, %v278
    %v329 = vpack.c.b16 %v281, %v279
    %v330 = vpack.c.b16 %v284, %v282
    %v331 = vpack.c.b16 %v285, %v283
    %v332 = vpack.c.b16 %v288, %v286
    %v333 = vpack.c.b16 %v289, %v287
    %v334 = vpack.c.b16 %v292, %v290
    %v335 = vpack.c.b16 %v293, %v291
    %v336 = vpack.c.b16 %v296, %v294
    %v337 = vpack.c.b16 %v297, %v295
    %v338 = vpack.c.b16 %v300, %v298
    %v339 = vpack.c.b16 %v301, %v299
    %v340 = vpack.c.b16 %v304, %v302
    %v341 = vpack.c.b16 %v305, %v303
    %v342 = vpack.c.b16 %v308, %v306
    %v343 = vpack.c.b16 %v309, %v307
    %v344 = vpack.c.b16 %v312, %v310
    %v345 = vpack.c.b16 %v313, %v311
    %378 = vmatprep.subr.bf16.mxu0 %v329
    %379 = vmatpush1.bf16.msra.mxu0 %v328
    %380 = vmatprep.subr.bf16.mxu0 %v327
    %381 = vmatpush1.bf16.msra.mxu0 %v326
    %382 = vmatprep.subr.bf16.mxu0 %v325
    %383 = vmatpush1.bf16.msra.mxu0 %v324
    %384 = vmatprep.subr.bf16.mxu0 %v323
    %385 = vmatpush1.bf16.msra.mxu0 %v322
    %386 = vmatprep.subr.bf16.mxu0 %v321
    %387 = vmatpush1.bf16.msra.mxu0 %v320
    %388 = vmatprep.subr.bf16.mxu0 %v319
    %389 = vmatpush1.bf16.msra.mxu0 %v318
    %390 = vmatprep.subr.bf16.mxu0 %v317
    %391 = vmatpush1.bf16.msra.mxu0 %v316
    %392 = vmatprep.subr.bf16.mxu0 %v315
    %393 = vmatpush1.bf16.msra.mxu0 %v314
    %394 = vmatprep.subr.bf16.mxu0 %v345
    %395 = vmatpush2.bf16.msra.mxu0 %v344
    %396 = vmatprep.subr.bf16.mxu0 %v343
    %397 = vmatpush2.bf16.msra.mxu0 %v342
    %398 = vmatprep.subr.bf16.mxu0 %v341
    %399 = vmatpush2.bf16.msra.mxu0 %v340
    %400 = vmatprep.subr.bf16.mxu0 %v339
    %401 = vmatpush2.bf16.msra.mxu0 %v338
    %402 = vmatprep.subr.bf16.mxu0 %v337
    %403 = vmatpush2.bf16.msra.mxu0 %v336
    %404 = vmatprep.subr.bf16.mxu0 %v335
    %405 = vmatpush2.bf16.msra.mxu0 %v334
    %406 = vmatprep.subr.bf16.mxu0 %v333
    %407 = vmatpush2.bf16.msra.mxu0 %v332
    %408 = vmatprep.subr.bf16.mxu0 %v331
    %409 = vmatpush2.bf16.msra.mxu0 %v330
    %410 = vmatprep.mubr.bf16.mxu0 %v167
    %411 = vmatmul.mubr.bf16.gmra.mxu0 %v166
    %v412 = vpop.f32.mrf.mxu0
    %v413 = vadd.f32 %v213, %v412
    %v414 = vpop.f32.mrf.mxu0
    %v415 = vadd.f32 %v217, %v414
    %v416 = vpop.f32.mrf.mxu0
    %v417 = vpop.f32.mrf.mxu0
    %418 = vdwg.mxu0
    %v419 = vmax.f32 %v413, 0.0
    %v420 = vmax.f32 %v415, 0.0
    %v421 = vpack.c.bf16 %v419, %v419
    %v422 = vpack.c.bf16 %v420, %v420
    %v423 = vld [vmem:[#allocation8] sm:$0xf]
    %v424 = vld [vmem:[#allocation8 + $0x4] sm:$0xf]
    %v425 = vld [vmem:[#allocation8 + $0x8] sm:$0xf]
    %v426 = vld [vmem:[#allocation8 + $0xc] sm:$0xf]
    %v427 = vld [vmem:[#allocation8 + $0x10] sm:$0xf]
    %v428 = vld [vmem:[#allocation8 + $0x14] sm:$0xf]
    %v429 = vld [vmem:[#allocation8 + $0x18] sm:$0xf]
    %v430 = vld [vmem:[#allocation8 + $0x1c] sm:$0xf]
    %v431 = vld [vmem:[#allocation8 + $0x20] sm:$0xf]
    %v432 = vld [vmem:[#allocation8 + $0x24] sm:$0xf]
    %v433 = vld [vmem:[#allocation8 + $0x28] sm:$0xf]
    %v434 = vld [vmem:[#allocation8 + $0x2c] sm:$0xf]
    %v435 = vld [vmem:[#allocation8 + $0x30] sm:$0xf]
    %v436 = vld [vmem:[#allocation8 + $0x34] sm:$0xf]
    %v437 = vld [vmem:[#allocation8 + $0x38] sm:$0xf]
    %v438 = vld [vmem:[#allocation8 + $0x3c] sm:$0xf]
    %v439 = vld [vmem:[#allocation8 + $0x40] sm:$0xf]
    %v440 = vld [vmem:[#allocation8 + $0x44] sm:$0xf]
    %v441 = vld [vmem:[#allocation8 + $0x48] sm:$0xf]
    %v442 = vld [vmem:[#allocation8 + $0x4c] sm:$0xf]
    %v443 = vld [vmem:[#allocation8 + $0x50] sm:$0xf]
    %v444 = vld [vmem:[#allocation8 + $0x54] sm:$0xf]
    %v445 = vld [vmem:[#allocation8 + $0x58] sm:$0xf]
    %v446 = vld [vmem:[#allocation8 + $0x5c] sm:$0xf]
    %v447 = vld [vmem:[#allocation8 + $0x60] sm:$0xf]
    %v448 = vld [vmem:[#allocation8 + $0x64] sm:$0xf]
    %v449 = vld [vmem:[#allocation8 + $0x68] sm:$0xf]
    %v450 = vld [vmem:[#allocation8 + $0x6c] sm:$0xf]
    %v451 = vld [vmem:[#allocation8 + $0x70] sm:$0xf]
    %v452 = vld [vmem:[#allocation8 + $0x74] sm:$0xf]
    %v453 = vld [vmem:[#allocation8 + $0x78] sm:$0xf]
    %v454 = vld [vmem:[#allocation8 + $0x7c] sm:$0xf]
    %v455 = vlaneseq
    %v456 = vshrl.u32 %v455, 7
    %v457 = vsub.s32 2, %v456
    %v458 = vrot.slane %v87, %v457
    %v491 = vunpack.c.l.b16 %v423
    %v492 = vunpack.c.l.b16 %v424
    %v493 = vunpack.c.l.b16 %v425
    %v494 = vunpack.c.l.b16 %v426
    %v495 = vunpack.c.l.b16 %v427
    %v496 = vunpack.c.l.b16 %v428
    %v497 = vunpack.c.l.b16 %v429
    %v498 = vunpack.c.l.b16 %v430
    %v499 = vunpack.c.l.b16 %v431
    %v500 = vunpack.c.l.b16 %v432
    %v501 = vunpack.c.l.b16 %v433
    %v502 = vunpack.c.l.b16 %v434
    %v503 = vunpack.c.l.b16 %v435
    %v504 = vunpack.c.l.b16 %v436
    %v505 = vunpack.c.l.b16 %v437
    %v506 = vunpack.c.l.b16 %v438
    %v507 = vunpack.c.l.b16 %v439
    %v508 = vunpack.c.l.b16 %v440
    %v509 = vunpack.c.l.b16 %v441
    %v510 = vunpack.c.l.b16 %v442
    %v511 = vunpack.c.l.b16 %v443
    %v512 = vunpack.c.l.b16 %v444
    %v513 = vunpack.c.l.b16 %v445
    %v514 = vunpack.c.l.b16 %v446
    %v515 = vunpack.c.l.b16 %v447
    %v516 = vunpack.c.l.b16 %v448
    %v517 = vunpack.c.l.b16 %v449
    %v518 = vunpack.c.l.b16 %v450
    %v519 = vunpack.c.l.b16 %v451
    %v520 = vunpack.c.l.b16 %v452
    %v521 = vunpack.c.l.b16 %v453
    %v522 = vunpack.c.l.b16 %v454
    %v523 = vpack.c.b16 %v492, %v491
    %v524 = vpack.c.b16 %v494, %v493
    %v525 = vpack.c.b16 %v496, %v495
    %v526 = vpack.c.b16 %v498, %v497
    %v527 = vpack.c.b16 %v500, %v499
    %v528 = vpack.c.b16 %v502, %v501
    %v529 = vpack.c.b16 %v504, %v503
    %v530 = vpack.c.b16 %v506, %v505
    %v531 = vpack.c.b16 %v508, %v507
    %v532 = vpack.c.b16 %v510, %v509
    %v533 = vpack.c.b16 %v512, %v511
    %v534 = vpack.c.b16 %v514, %v513
    %v535 = vpack.c.b16 %v516, %v515
    %v536 = vpack.c.b16 %v518, %v517
    %v537 = vpack.c.b16 %v520, %v519
    %v538 = vpack.c.b16 %v522, %v521
    %555 = vmatprep.subr.bf16.mxu0 0
    %556 = vmatpush1.bf16.msra.mxu0 %v530
    %557 = vmatprep.subr.bf16.mxu0 0
    %558 = vmatpush1.bf16.msra.mxu0 %v529
    %559 = vmatprep.subr.bf16.mxu0 0
    %560 = vmatpush1.bf16.msra.mxu0 %v528
    %561 = vmatprep.subr.bf16.mxu0 0
    %562 = vmatpush1.bf16.msra.mxu0 %v527
    %563 = vmatprep.subr.bf16.mxu0 0
    %564 = vmatpush1.bf16.msra.mxu0 %v526
    %565 = vmatprep.subr.bf16.mxu0 0
    %566 = vmatpush1.bf16.msra.mxu0 %v525
    %567 = vmatprep.subr.bf16.mxu0 0
    %568 = vmatpush1.bf16.msra.mxu0 %v524
    %569 = vmatprep.subr.bf16.mxu0 0
    %570 = vmatpush1.bf16.msra.mxu0 %v523
    %571 = vmatprep.subr.bf16.mxu0 0
    %572 = vmatpush2.bf16.msra.mxu0 %v538
    %573 = vmatprep.subr.bf16.mxu0 0
    %574 = vmatpush2.bf16.msra.mxu0 %v537
    %575 = vmatprep.subr.bf16.mxu0 0
    %576 = vmatpush2.bf16.msra.mxu0 %v536
    %577 = vmatprep.subr.bf16.mxu0 0
    %578 = vmatpush2.bf16.msra.mxu0 %v535
    %579 = vmatprep.subr.bf16.mxu0 0
    %580 = vmatpush2.bf16.msra.mxu0 %v534
    %581 = vmatprep.subr.bf16.mxu0 0
    %582 = vmatpush2.bf16.msra.mxu0 %v533
    %583 = vmatprep.subr.bf16.mxu0 0
    %584 = vmatpush2.bf16.msra.mxu0 %v532
    %585 = vmatprep.subr.bf16.mxu0 0
    %586 = vmatpush2.bf16.msra.mxu0 %v531
    %587 = vmatprep.mubr.bf16.mxu0 %v422
    %588 = vmatmul.mubr.bf16.gmra.mxu0 %v421
    %v589 = vpop.f32.mrf.mxu0
    %v590 = vadd.f32 %v458, %v589
    %v591 = vpop.f32.mrf.mxu0
    %v592 = vpop.f32.mrf.mxu0
    %v593 = vpop.f32.mrf.mxu0
    %594 = vdwg.mxu0
    %v595 = vlaneseq
    %v596 = vand.u32 %v595, 127
    %v597 = vmul.f32 %v590, 0.5
    %v598 = vtanh.pop %v597
    %v599 = vadd.f32 %v598, 1.0
    %v600 = vmul.f32 %v599, 0.5
    %v601 = vmul.f32 %v600, 0.22
    %v602 = vtanh.pop %v590
    %v603 = vmul.f32 %v602, 2.0
    %vm604 = vcmp.eq.s32.totalorder %v596, 0
    %vm605 = vcmp.eq.s32.totalorder %v596, 1
    %v606 = vsel %vm605, %v603, %v590
    %v607 = vsel %vm604, %v601, %v606
    %608 = vst [vmem:[#allocation11] sm:$0xff] %v607
    // Predicated region
    $region42: #{tpu_custom_call.1} parent=1 // pred_check
      _
    $region43: #{tpu_custom_call.1} parent=1 // pred_check_branch
      %610 = sbr.rel (0) target = $region45
    $region44: #{tpu_custom_call.1} parent=1 // pred_region
      %s612 = ssub.s32 128, 128
      %613 = vsyncadd [#allocation4], %s612
      %s615 = sshll.u32 [#allocation11], 4
      %s616 = int_to_ptr.vmem [resolvable:$true] %s615
      %618 = dma.vmem_to_hbm [thread:$0]  %s616, 128, %s5, [#allocation4]
    $region45: #{tpu_custom_call.1} parent=1 // pred_fallthru
      _
    // Predicated region
    $region46: #{tpu_custom_call.1} parent=1 // pred_check
      _
    $region47: #{tpu_custom_call.1} parent=1 // pred_check_branch
      %620 = sbr.rel (0) target = $region49
    $region48: #{tpu_custom_call.1} parent=1 // pred_region
      %621 = dma.done [#allocation4], 128
    $region49: #{tpu_custom_call.1} parent=1 // pred_fallthru
      _
    %622 = vsyncpa [#allocation3], 1
    %623 = vsyncpa [#allocation6], 1
    %624 = vsyncpa [#allocation9], 1
    %625 = vsyncpa [#allocation4], 1

</llo_original>
